<compile_context>
chip_gen: v5e
topology: v5e:2x2
jax: 0.10.0
libtpu: 0.0.40
codegen_flags: <defaults>
</compile_context>

<pallas_src>
import functools

import jax
import jax.numpy as jnp
from jax.experimental import pallas as pl
from jax.experimental.pallas import tpu as pltpu


def _round_up(x, m):
    return ((x + m - 1) // m) * m


@functools.lru_cache(maxsize=1)
def _vmem_limit_bytes():
    # ~75% of physical per-core VMEM (~48 MiB v7x, ~96 MiB v5e/v6e); fall back to
    # the previously-known-good 64 MiB if the query is unavailable.
    cap = None
    try:
        cap = int(getattr(pltpu.get_tpu_info(), "vmem_capacity_bytes", 0)) or None
    except Exception:
        cap = None
    if cap is None:
        return 64 * 1024 * 1024
    return max(32 * 1024 * 1024, (cap * 3) // 4)


def _compiler_params(dim_sem):
    return pltpu.CompilerParams(dimension_semantics=dim_sem,
                                vmem_limit_bytes=_vmem_limit_bytes())


def _elu(x):
    # exp(min(x, 0)) keeps the discarded positive branch finite (no inf generation).
    # TODO(synk): expm1 would be marginally more accurate near 0; exp-1 kept for
    #             guaranteed Mosaic lowering.
    return jnp.where(x > 0, x, jnp.exp(jnp.minimum(x, 0.0)) - 1.0)


# ----------------------------------------------------------------------------
# Batched per-node-type linears: one pallas_call, grid = (type, row tiles)
# ----------------------------------------------------------------------------
def _typed_linear_kernel(x_ref, w_ref, b_ref, o_ref):
    o_ref[0] = jnp.dot(x_ref[0], w_ref[0],
                       preferred_element_type=jnp.float32) + b_ref[0]


def typed_linear_pallas(feat_list, w_list, b_list, hidden_dim):
    """All per-type nn.Linear(m_i, hidden) layers fused into one pallas_call."""
    ntype = len(feat_list)
    n_list = [int(f.shape[0]) for f in feat_list]
    din_p = _round_up(max(int(f.shape[1]) for f in feat_list), 8)
    hid_p = _round_up(hidden_dim, 128)
    rt = min(256, _round_up(max(n_list), 16))
    n_pad = _round_up(max(n_list), rt)

    x_all = jnp.stack([
        jnp.pad(f.astype(jnp.bfloat16),
                ((0, n_pad - f.shape[0]), (0, din_p - f.shape[1])))
        for f in feat_list])                                        # (T, n_pad, din_p) bf16
    w_all = jnp.stack([
        jnp.pad(w.astype(jnp.bfloat16),
                ((0, din_p - w.shape[0]), (0, hid_p - hidden_dim)))
        for w in w_list])                                           # (T, din_p, hid_p) bf16
    b_all = jnp.stack([
        jnp.pad(b.astype(jnp.float32).reshape(1, -1), ((0, 0), (0, hid_p - hidden_dim)))
        for b in b_list])                                           # (T, 1, hid_p) f32

    out = pl.pallas_call(
        _typed_linear_kernel,
        out_shape=jax.ShapeDtypeStruct((ntype, n_pad, hid_p), jnp.float32),
        grid=(ntype, n_pad // rt),
        in_specs=[
            pl.BlockSpec((1, rt, din_p), lambda t, i: (t, i, 0)),
            pl.BlockSpec((1, din_p, hid_p), lambda t, i: (t, 0, 0)),
            pl.BlockSpec((1, 1, hid_p), lambda t, i: (t, 0, 0)),
        ],
        out_specs=pl.BlockSpec((1, rt, hid_p), lambda t, i: (t, i, 0)),
        compiler_params=_compiler_params(("parallel", "parallel")),
    )(x_all, w_all, b_all)
    return [out[i, :n_list[i], :hidden_dim] for i in range(ntype)]


# ----------------------------------------------------------------------------
# Single linear: o = x @ W + b (row-tiled, lane-padded output, bf16 MXU / f32 acc)
# ----------------------------------------------------------------------------
def _linear_kernel(x_ref, w_ref, b_ref, o_ref):
    o_ref[...] = jnp.dot(x_ref[...], w_ref[...],
                         preferred_element_type=jnp.float32) + b_ref[...]


def linear_pallas(x, w_t, b, row_tile=256):
    x = x.astype(jnp.bfloat16)
    n, din = x.shape
    dout = w_t.shape[1]
    dout_p = _round_up(dout, 128)
    rt = min(row_tile, _round_up(n, 16))
    n_pad = _round_up(n, rt)
    x_p = jnp.pad(x, ((0, n_pad - n), (0, 0)))
    w_p = jnp.pad(w_t.astype(jnp.bfloat16), ((0, 0), (0, dout_p - dout)))
    b_p = jnp.pad(b.astype(jnp.float32).reshape(1, dout), ((0, 0), (0, dout_p - dout)))
    out = pl.pallas_call(
        _linear_kernel,
        out_shape=jax.ShapeDtypeStruct((n_pad, dout_p), jnp.float32),
        grid=(n_pad // rt,),
        in_specs=[
            pl.BlockSpec((rt, din), lambda i: (i, 0)),
            pl.BlockSpec((din, dout_p), lambda i: (0, 0)),
            pl.BlockSpec((1, dout_p), lambda i: (0, 0)),
        ],
        out_specs=pl.BlockSpec((rt, dout_p), lambda i: (i, 0)),
        compiler_params=_compiler_params(("parallel",)),
    )(x_p, w_p, b_p)
    return out[:n, :dout]


# ----------------------------------------------------------------------------
# HGNN_AC attention completion.
# grid = (dst tiles [parallel], heads, src tiles) with online masked softmax.
# h1 = emb_src @ W[h] and t2 = (emb_dst @ W[h]) @ W2[h] are hoisted (XLA, once).
# ----------------------------------------------------------------------------
def _ac_kernel(bias_ref, t2_ref, h1t_ref, feat_ref, o_ref,
               m_sc, l_sc, acc_sc, out_sc, *, inv_heads, ns_real, ns_tile):
    h = pl.program_id(1)
    s = pl.program_id(2)
    last_h = pl.num_programs(1) - 1
    last_s = pl.num_programs(2) - 1

    @pl.when(jnp.logical_and(h == 0, s == 0))
    def _():
        out_sc[...] = jnp.zeros_like(out_sc)            # mean-over-heads accumulator

    @pl.when(s == 0)
    def _():
        m_sc[...] = jnp.full_like(m_sc, -jnp.inf)
        l_sc[...] = jnp.zeros_like(l_sc)
        acc_sc[...] = jnp.zeros_like(acc_sc)

    # attention logits for this (dst tile, head, src tile): no transpose needed.
    e = jnp.dot(t2_ref[0], h1t_ref[0], preferred_element_type=jnp.float32)  # (rt, ns_tile)
    e = jnp.where(e > 0, e, jnp.float32(0.2) * e)                           # LeakyReLU(0.2)
    logit = jnp.where(bias_ref[...] > 0, e, jnp.float32(-9e15))             # masked softmax
    col = jax.lax.broadcasted_iota(jnp.int32, e.shape, 1) + s * ns_tile
    logit = jnp.where(col < ns_real, logit, -jnp.inf)                       # drop Ns padding

    # online (flash-style) softmax over source tiles
    m_new = jnp.maximum(m_sc[...], jnp.max(logit, axis=1, keepdims=True))
    alpha = jnp.exp(m_sc[...] - m_new)
    p = jnp.exp(logit - m_new)                                              # one exp per entry
    l_sc[...] = alpha * l_sc[...] + jnp.sum(p, axis=1, keepdims=True)
    acc_sc[...] = alpha * acc_sc[...] + jnp.dot(
        p.astype(jnp.bfloat16), feat_ref[...], preferred_element_type=jnp.float32)
    m_sc[...] = m_new

    @pl.when(s == last_s)
    def _():
        inv = pl.reciprocal(l_sc[...], approx=True)
        out_sc[...] = out_sc[...] + _elu(acc_sc[...] * inv)                 # F.elu

    @pl.when(jnp.logical_and(h == last_h, s == last_s))
    def _():
        o_ref[...] = out_sc[...] * jnp.float32(inv_heads)                   # mean over heads


def hgnn_ac_pallas(bias, emb_dest, emb_src, feat_src, w_stack, w2_stack,
                   nd_tile=256, ns_tile_max=512):
    """HGNN_AC.forward (eval): masked attention per head, mean over heads."""
    num_heads, _, attn_dim = w_stack.shape
    nd, ns = bias.shape
    df = feat_src.shape[1]
    df_p = _round_up(df, 128)
    rt = min(nd_tile, _round_up(nd, 32))
    nd_pad = _round_up(nd, rt)
    ns_tile = min(ns_tile_max, _round_up(ns, 128))
    ns_pad = _round_up(ns, ns_tile)

    # hoisted per-head projections (computed once, f32, shipped bf16 pre-transposed)
    w_f = w_stack.astype(jnp.float32)
    h1t = jnp.einsum('se,hea->has', emb_src.astype(jnp.float32), w_f)        # (H, A, Ns)
    h2 = jnp.einsum('de,hea->hda', emb_dest.astype(jnp.float32), w_f)        # (H, Nd, A)
    t2 = jnp.einsum('hda,hab->hdb', h2, w2_stack.astype(jnp.float32))        # (H, Nd, A)

    bias_p = jnp.pad((bias > 0).astype(jnp.bfloat16),
                     ((0, nd_pad - nd), (0, ns_pad - ns)))
    t2_p = jnp.pad(t2.astype(jnp.bfloat16), ((0, 0), (0, nd_pad - nd), (0, 0)))
    h1t_p = jnp.pad(h1t.astype(jnp.bfloat16), ((0, 0), (0, 0), (0, ns_pad - ns)))
    feat_p = jnp.pad(feat_src.astype(jnp.bfloat16),
                     ((0, ns_pad - ns), (0, df_p - df)))

    kernel = functools.partial(_ac_kernel, inv_heads=1.0 / num_heads,
                               ns_real=ns, ns_tile=ns_tile)
    out = pl.pallas_call(
        kernel,
        out_shape=jax.ShapeDtypeStruct((nd_pad, df_p), jnp.float32),
        grid_spec=pltpu.PrefetchScalarGridSpec(
            num_scalar_prefetch=0,
            grid=(nd_pad // rt, num_heads, ns_pad // ns_tile),
            in_specs=[
                pl.BlockSpec((rt, ns_tile), lambda i, h, s: (i, s)),           # mask tile (bf16)
                pl.BlockSpec((1, rt, attn_dim), lambda i, h, s: (h, i, 0)),    # (emb_dst W) W2
                pl.BlockSpec((1, attn_dim, ns_tile), lambda i, h, s: (h, 0, s)),  # (emb_src W)^T
                pl.BlockSpec((ns_tile, df_p), lambda i, h, s: (s, 0)),         # feature_src
            ],
            out_specs=pl.BlockSpec((rt, df_p), lambda i, h, s: (i, 0)),
            scratch_shapes=[
                pltpu.VMEM((rt, 1), jnp.float32),      # running max
                pltpu.VMEM((rt, 1), jnp.float32),      # running denominator
                pltpu.VMEM((rt, df_p), jnp.float32),   # running numerator
                pltpu.VMEM((rt, df_p), jnp.float32),   # mean-over-heads accumulator
            ],
        ),
        compiler_params=_compiler_params(("parallel", "arbitrary", "arbitrary")),
    )(bias_p, t2_p, h1t_p, feat_p)
    return out[:nd, :df]


# ----------------------------------------------------------------------------
# Fused MAGNN metapath-specific layers (rnn_type='linear') + ctr epilogue.
# grid = (metapaths [parallel], E tiles [arbitrary/reduction]).
# ----------------------------------------------------------------------------
def _metapath_ctr_kernel(x_ref, dst_ref, w_ref, b_ref, a_ref, s_ref,
                         w1_ref, b1_ref, w2_ref,
                         ofeat_ref, obeta_ref,
                         numer, denom, mrun,
                         *, t_real, t_pad, e_tile):
    k = pl.program_id(1)
    nk = pl.num_programs(1)
    bf = jnp.bfloat16

    @pl.when(k == 0)
    def _():
        numer[...] = jnp.zeros_like(numer)
        denom[...] = jnp.zeros_like(denom)
        mrun[...] = jnp.full_like(mrun, -jnp.inf)

    # mean over the metapath-instance axis was done in the gather stage -> (e_tile, hidden)
    x = x_ref[0]                                                       # bf16
    hid = jnp.dot(x, w_ref[0], preferred_element_type=jnp.float32) + b_ref[0]   # (e_tile, HDp)
    # all-head attention scores with one matmul (block-diagonal attn projection)
    a = jnp.dot(hid.astype(bf), a_ref[0], preferred_element_type=jnp.float32)   # (e_tile, H)
    a = jnp.where(a > 0, a, jnp.float32(0.01) * a)                     # LeakyReLU(0.01)

    # online (flash-style) per-head edge-softmax state over E tiles
    m_old = mrun[...]                                                  # (1, H)
    m_new = jnp.maximum(m_old, jnp.max(a, axis=0, keepdims=True))
    alpha = jnp.exp(m_old - m_new)                                     # (1, H)
    exp_a = jnp.exp(a - m_new)                                         # (e_tile, H)

    # per-target scatter matrix built in-kernel from int32 target slots (no dense HBM mask)
    dst = dst_ref[0]                                                   # (1, e_tile), -1 = pad
    tgt = jax.lax.broadcasted_iota(jnp.int32, (t_pad, e_tile), 0)
    m_t = (tgt == dst).astype(bf)                                      # (t_pad, e_tile)

    sel = s_ref[...]                                                   # (H, HDp) bf16 selector
    exp_a_w = jnp.dot(exp_a.astype(bf), sel, preferred_element_type=jnp.float32)
    alpha_w = jnp.dot(alpha.astype(bf), sel, preferred_element_type=jnp.float32)
    weighted = hid * exp_a_w

    numer[...] = numer[...] * alpha_w + jnp.dot(
        m_t, weighted.astype(bf), preferred_element_type=jnp.float32)
    denom[...] = denom[...] * alpha + jnp.dot(
        m_t, exp_a.astype(bf), preferred_element_type=jnp.float32)
    mrun[...] = m_new

    @pl.when(k == nk - 1)
    def _():
        d = denom[...]
        inv = pl.reciprocal(jnp.where(d == 0, jnp.float32(1.0), d), approx=True)   # (t_pad, H)
        inv_w = jnp.dot(inv, sel.astype(jnp.float32),
                        preferred_element_type=jnp.float32)                        # once per metapath
        out = _elu(numer[...] * inv_w)                                             # F.elu
        ofeat_ref[0] = out
        # fused metapath-level attention logit: mean_t tanh(out @ W1 + b1) @ W2
        fc1 = jnp.tanh(jnp.dot(out.astype(bf), w1_ref[...],
                               preferred_element_type=jnp.float32) + b1_ref[...])  # (t_pad, A)
        rmask = (jax.lax.broadcasted_iota(jnp.int32, (t_pad, 1), 0)
                 < t_real).astype(jnp.float32)
        fc1_mean = jnp.sum(fc1 * rmask, axis=0, keepdims=True) * jnp.float32(1.0 / t_real)
        obeta_ref[0] = jnp.dot(fc1_mean, w2_ref[...], preferred_element_type=jnp.float32)


def metapath_ctr_pallas(x_all, dst_all, w_all, b_all, a_all, s_sel,
                        w1, b1, w2, *, t_real, t_pad, e_tile):
    m_paths, e_pad, hidden = x_all.shape
    hdp = w_all.shape[2]
    num_heads = s_sel.shape[0]
    avd = w1.shape[1]
    nk = e_pad // e_tile
    kernel = functools.partial(_metapath_ctr_kernel,
                               t_real=t_real, t_pad=t_pad, e_tile=e_tile)
    return pl.pallas_call(
        kernel,
        out_shape=(jax.ShapeDtypeStruct((m_paths, t_pad, hdp), jnp.float32),
                   jax.ShapeDtypeStruct((m_paths, 1, 1), jnp.float32)),
        grid_spec=pltpu.PrefetchScalarGridSpec(
            num_scalar_prefetch=0,
            grid=(m_paths, nk),
            in_specs=[
                pl.BlockSpec((1, e_tile, hidden), lambda p, k: (p, k, 0)),   # x (mean over L) bf16
                pl.BlockSpec((1, 1, e_tile), lambda p, k: (p, 0, k)),        # target slots int32
                pl.BlockSpec((1, hidden, hdp), lambda p, k: (p, 0, 0)),      # rnn W bf16
                pl.BlockSpec((1, 1, hdp), lambda p, k: (p, 0, 0)),           # rnn bias f32
                pl.BlockSpec((1, hdp, num_heads), lambda p, k: (p, 0, 0)),   # attn proj bf16
                pl.BlockSpec((num_heads, hdp), lambda p, k: (0, 0)),         # head selector bf16
                pl.BlockSpec((hdp, avd), lambda p, k: (0, 0)),               # ctr fc1 W bf16
                pl.BlockSpec((1, avd), lambda p, k: (0, 0)),                 # ctr fc1 b f32
                pl.BlockSpec((avd, 1), lambda p, k: (0, 0)),                 # ctr fc2 W f32
            ],
            out_specs=[
                pl.BlockSpec((1, t_pad, hdp), lambda p, k: (p, 0, 0)),       # per-metapath feats
                pl.BlockSpec((1, 1, 1), lambda p, k: (p, 0, 0)),             # beta logit
            ],
            scratch_shapes=[
                pltpu.VMEM((t_pad, hdp), jnp.float32),        # softmax numerator
                pltpu.VMEM((t_pad, num_heads), jnp.float32),  # softmax denominator
                pltpu.VMEM((1, num_heads), jnp.float32),      # running max per head
            ],
        ),
        compiler_params=_compiler_params(("parallel", "arbitrary")),
    )(x_all, dst_all, w_all, b_all, a_all, s_sel, w1, b1, w2)


# ----------------------------------------------------------------------------
# Parameters (deterministic, xavier-normal-style)
# ----------------------------------------------------------------------------
def make_params(key, in_dims, emb_dim, hidden_dim, out_dim,
                num_heads, attn_vec_dim, num_metapaths):
    ks = iter(jax.random.split(key, 64))

    def xav(shape, gain=1.414):
        fan_in, fan_out = shape[-2], shape[-1]
        std = gain * (2.0 / (fan_in + fan_out)) ** 0.5
        return (std * jax.random.normal(next(ks), shape)).astype(jnp.float32)

    def bias_init(fan_in, size):
        bound = 1.0 / (fan_in ** 0.5)
        return jax.random.uniform(next(ks), (size,), jnp.float32, -bound, bound)

    hd = num_heads * hidden_dim
    params = {
        "fc_list": [(xav((m, hidden_dim)), bias_init(m, hidden_dim)) for m in in_dims],
        "ac_W": xav((num_heads, emb_dim, attn_vec_dim), gain=2.0 ** 0.5),
        "ac_W2": xav((num_heads, attn_vec_dim, attn_vec_dim), gain=2.0 ** 0.5),
        "metapath": [
            (xav((hidden_dim, hd), gain=1.0),     # rnn linear weight (in, H*hidden)
             bias_init(hidden_dim, hd),           # rnn bias
             xav((num_heads, hidden_dim)))        # attn vector per head
            for _ in range(num_metapaths)
        ],
        "ctr_fc1_w": xav((hd, attn_vec_dim)),
        "ctr_fc1_b": bias_init(hd, attn_vec_dim),
        "ctr_fc2_w": xav((attn_vec_dim, 1)),
        "fc_w": xav((hd, out_dim)),
        "fc_b": bias_init(hd, out_dim),
    }
    return params


# ----------------------------------------------------------------------------
# MAGNN_nc_mb_AC.forward
# ----------------------------------------------------------------------------
def magnn_nc_mb_ac_forward(params, higher_order_matrix, feat_opt,
                           inputs1, inputs2, hidden_dim, num_heads):
    adj, feat_list, emb, mask_list, feat_keep_idx, feat_drop_idx, node_type_src = inputs1
    g_list, type_mask, edge_metapath_indices_list, target_idx_list = inputs2
    del adj, feat_keep_idx, feat_drop_idx  # unused in forward (as in the module)

    n_total = type_mask.shape[0]

    # ---- per-type feature transformation (one fused pallas_call, then scatter) ----
    fc_outs = typed_linear_pallas(feat_list,
                                  [w for (w, _) in params["fc_list"]],
                                  [b for (_, b) in params["fc_list"]],
                                  hidden_dim)
    transformed = jnp.zeros((n_total, hidden_dim), jnp.float32)
    for i, out_i in enumerate(fc_outs):
        node_indices = jnp.where(type_mask == i)[0]
        transformed = transformed.at[node_indices].set(out_i)

    # ---- attribute completion for types with feat_opt == 1 ----
    for i, opt in enumerate(feat_opt):
        if opt == 1:
            bias = higher_order_matrix[mask_list[i]][:, mask_list[node_type_src]]
            feat_ac = hgnn_ac_pallas(
                bias,
                emb[mask_list[i]],
                emb[mask_list[node_type_src]],
                transformed[mask_list[node_type_src]],
                params["ac_W"], params["ac_W2"])
            transformed = transformed.at[mask_list[i]].set(feat_ac)

    features = transformed  # feat_drop: eval-mode dropout == identity

    # ---- fused MAGNN_nc_mb_layer / ctr_ntype_specific ----
    H = num_heads
    D = hidden_dim
    HD = H * D
    HDp = _round_up(HD, 128)
    M = len(params["metapath"])
    T = int(target_idx_list[0].shape[0])
    T_pad = _round_up(T, 8)
    E_max = max(int(idx.shape[0]) for idx in edge_metapath_indices_list)
    e_tile = min(2048, _round_up(E_max, 128))
    E_pad = _round_up(E_max, e_tile)

    x_list, dst_list, w_list, b_list, a_list = [], [], [], [], []
    for p, (w_t, b, attn_vec) in enumerate(params["metapath"]):
        idx = edge_metapath_indices_list[p]              # (E, L) global node ids
        E = int(idx.shape[0])
        x = jnp.mean(features[idx], axis=1)              # (E, hidden): mean over metapath nodes
        x = jnp.pad(x, ((0, E_pad - E), (0, 0)))
        # remap local edge destinations to target slots; -1 == not a target / padding
        dst = g_list[p]
        tgt = target_idx_list[p]
        eq = dst[:, None] == tgt[None, :]
        slot = jnp.where(eq.any(axis=1), jnp.argmax(eq, axis=1), -1).astype(jnp.int32)
        slot = jnp.pad(slot, (0, E_pad - E), constant_values=-1)
        x_list.append(x.astype(jnp.bfloat16))
        dst_list.append(slot.reshape(1, E_pad))
        w_list.append(jnp.pad(w_t, ((0, 0), (0, HDp - HD))).astype(jnp.bfloat16))
        b_list.append(jnp.pad(b.reshape(1, HD), ((0, 0), (0, HDp - HD))))
        a_mat = jnp.zeros((HDp, H), jnp.float32)
        for h in range(H):
            a_mat = a_mat.at[h * D:(h + 1) * D, h].set(attn_vec[h])
        a_list.append(a_mat.astype(jnp.bfloat16))

    x_all = jnp.stack(x_list)                            # (M, E_pad, hidden) bf16
    dst_all = jnp.stack(dst_list)                        # (M, 1, E_pad) int32
    w_all = jnp.stack(w_list)                            # (M, hidden, HDp) bf16
    b_all = jnp.stack(b_list)                            # (M, 1, HDp) f32
    a_all = jnp.stack(a_list)                            # (M, HDp, H) bf16

    s_sel = jnp.zeros((H, HDp), jnp.float32)             # head -> column-block selector
    for h in range(H):
        s_sel = s_sel.at[h, h * D:(h + 1) * D].set(1.0)
    s_sel = s_sel.astype(jnp.bfloat16)

    w1 = jnp.pad(params["ctr_fc1_w"], ((0, HDp - HD), (0, 0))).astype(jnp.bfloat16)
    b1 = params["ctr_fc1_b"].reshape(1, -1)
    w2 = params["ctr_fc2_w"]                             # (attn_vec_dim, 1) f32

    feat_out, beta_logit = metapath_ctr_pallas(
        x_all, dst_all, w_all, b_all, a_all, s_sel, w1, b1, w2,
        t_real=T, t_pad=T_pad, e_tile=e_tile)

    beta = jax.nn.softmax(beta_logit.reshape(M))         # metapath-level attention
    outs = feat_out[:, :T, :HD]                          # strip padding -> (M, T, H*hidden)
    h_out = jnp.einsum('m,mtd->td', beta, outs)          # (T, H*hidden)

    logits = linear_pallas(h_out, params["fc_w"], params["fc_b"])   # (T, out_dim)
    attn = beta
    return logits, h_out, attn


# ----------------------------------------------------------------------------
# Driver
# ----------------------------------------------------------------------------
if __name__ == "__main__":
    key = jax.random.PRNGKey(0)
    keys = jax.random.split(key, 16)

    # config (small, consistent with the module)
    in_dims = [10, 12, 14]          # per-node-type raw feature dims
    emb_dim = 8                     # topological embedding dim
    hidden_dim = 16                 # layer1 in_dim
    out_dim = 3                     # num classes
    num_heads = 2
    attn_vec_dim = 16
    num_metapaths = 2
    num_edge_type = 4               # only used for r_vec variants (not rnn_type='linear')
    feat_opt = [1, 0, 0]            # complete attributes of node type 0
    node_type_src = 1               # source type for attribute completion

    n_per_type = [6, 8, 6]
    n_total = sum(n_per_type)

    type_mask = jnp.concatenate(
        [jnp.full((n,), i, jnp.int32) for i, n in enumerate(n_per_type)])
    mask_list = [jnp.where(type_mask == i)[0] for i in range(len(n_per_type))]

    feat_list = [
        jax.random.normal(keys[i], (n_per_type[i], in_dims[i]), jnp.float32)
        for i in range(len(n_per_type))
    ]
    emb = jax.random.normal(keys[3], (n_total, emb_dim), jnp.float32)
    higher_order_matrix = (jax.random.uniform(keys[4], (n_total, n_total)) > 0.5
                           ).astype(jnp.float32)
    adj = higher_order_matrix                       # only used for .device in torch
    feat_keep_idx = jnp.arange(3, dtype=jnp.int32)  # unused in forward
    feat_drop_idx = jnp.arange(3, dtype=jnp.int32)  # unused in forward

    # synthetic minibatch metapath data
    T = 4            # number of target nodes (same batch for every metapath)
    L = 3            # metapath length (number of nodes per instance)
    E_list = [10, 12]
    g_list, edge_metapath_indices_list, target_idx_list = [], [], []
    for p in range(num_metapaths):
        E = E_list[p]
        target_idx = jnp.arange(T, dtype=jnp.int32)          # local target node ids
        dst = jnp.concatenate([
            jnp.arange(T, dtype=jnp.int32),
            jax.random.randint(keys[5 + p], (E - T,), 0, T, dtype=jnp.int32),
        ])
        idx = jax.random.randint(keys[8 + p], (E, L), 0, n_total, dtype=jnp.int32)
        g_list.append(dst)
        edge_metapath_indices_list.append(idx)
        target_idx_list.append(target_idx)

    params = make_params(keys[12], in_dims, emb_dim, hidden_dim, out_dim,
                         num_heads, attn_vec_dim, num_metapaths)

    inputs1 = (adj, feat_list, emb, mask_list, feat_keep_idx, feat_drop_idx,
               node_type_src)
    inputs2 = (g_list, type_mask, edge_metapath_indices_list, target_idx_list)

    logits, h, attn = magnn_nc_mb_ac_forward(
        params, higher_order_matrix, feat_opt, inputs1, inputs2,
        hidden_dim, num_heads)

    jax.block_until_ready((logits, h, attn))
    assert logits.shape == (T, out_dim)
    assert h.shape == (T, num_heads * hidden_dim)
    assert attn.shape == (num_metapaths,)
    print("KERNEL_OK")
</pallas_src>

<mosaic_0001>
module attributes {stable_mosaic.version = 11 : i64} {
  func.func @_typed_linear_kernel(%arg0: i32, %arg1: i32, %arg2: memref<1x16x16xbf16, #tpu.memory_space<vmem>>, %arg3: memref<1x16x128xbf16, #tpu.memory_space<vmem>>, %arg4: memref<1x1x128xf32, #tpu.memory_space<vmem>>, %arg5: memref<1x16x128xf32, #tpu.memory_space<vmem>>) attributes {dimension_semantics = [#tpu.dimension_semantics<parallel>, #tpu.dimension_semantics<parallel>], iteration_bounds = array<i64: 3, 1>, scalar_prefetch = 0 : i64, scratch_operands = 0 : i64, tpu.core_type = #tpu.core_type<tc>, window_params = [{transform_indices = @transform_0, window_bounds = array<i64: 1, 16, 16>}, {transform_indices = @transform_1, window_bounds = array<i64: 1, 16, 128>}, {transform_indices = @transform_2, window_bounds = array<i64: 1, 1, 128>}, {transform_indices = @transform_3, window_bounds = array<i64: 1, 16, 128>}]} {
    %c0 = arith.constant 0 : index
    %c0_0 = arith.constant 0 : index
    %c0_1 = arith.constant 0 : index
    %0 = vector.load %arg2[%c0, %c0_0, %c0_1] : memref<1x16x16xbf16, #tpu.memory_space<vmem>>, vector<1x16x16xbf16>
    %1 = vector.shape_cast %0 : vector<1x16x16xbf16> to vector<16x16xbf16>
    %c0_2 = arith.constant 0 : index
    %c0_3 = arith.constant 0 : index
    %c0_4 = arith.constant 0 : index
    %2 = vector.load %arg3[%c0_2, %c0_3, %c0_4] : memref<1x16x128xbf16, #tpu.memory_space<vmem>>, vector<1x16x128xbf16>
    %3 = vector.shape_cast %2 : vector<1x16x128xbf16> to vector<16x128xbf16>
    %cst = arith.constant dense<0.000000e+00> : vector<16x128xf32>
    %4 = tpu.matmul %1, %3, %cst {dimension_numbers = #tpu.dot_dimension_numbers<[1], [0], [0], [1], [0, 0, 1, 1], [], []>} : vector<16x16xbf16>, vector<16x128xbf16>, vector<16x128xf32> -> vector<16x128xf32>
    %c0_5 = arith.constant 0 : index
    %c0_6 = arith.constant 0 : index
    %c0_7 = arith.constant 0 : index
    %5 = vector.load %arg4[%c0_5, %c0_6, %c0_7] : memref<1x1x128xf32, #tpu.memory_space<vmem>>, vector<1x1x128xf32>
    %6 = vector.shape_cast %5 : vector<1x1x128xf32> to vector<1x128xf32>
    %7 = vector.broadcast %6 : vector<1x128xf32> to vector<16x128xf32>
    %8 = arith.addf %4, %7 : vector<16x128xf32>
    %c0_8 = arith.constant 0 : index
    %c0_9 = arith.constant 0 : index
    %c0_10 = arith.constant 0 : index
    %9 = vector.load %arg5[%c0_8, %c0_9, %c0_10] : memref<1x16x128xf32, #tpu.memory_space<vmem>>, vector<1x16x128xf32>
    %10 = vector.shape_cast %9 : vector<1x16x128xf32> to vector<16x128xf32>
    %11 = vector.shape_cast %8 : vector<16x128xf32> to vector<1x16x128xf32>
    tpu.vector_store %arg5[%c0_8, %c0_9, %c0_10], %11 {strides = array<i32>} : memref<1x16x128xf32, #tpu.memory_space<vmem>>, vector<1x16x128xf32>,
    return
  }
  func.func @transform_0(%arg0: i32, %arg1: i32) -> (i32, i32, i32) {
    %c0_i32 = arith.constant 0 : i32
    %c0_i32_0 = arith.constant 0 : i32
    return %arg0, %arg1, %c0_i32 : i32, i32, i32
  }
  func.func @transform_1(%arg0: i32, %arg1: i32) -> (i32, i32, i32) {
    %c0_i32 = arith.constant 0 : i32
    %c0_i32_0 = arith.constant 0 : i32
    %c0_i32_1 = arith.constant 0 : i32
    return %arg0, %c0_i32, %c0_i32_0 : i32, i32, i32
  }
  func.func @transform_2(%arg0: i32, %arg1: i32) -> (i32, i32, i32) {
    %c0_i32 = arith.constant 0 : i32
    %c0_i32_0 = arith.constant 0 : i32
    %c0_i32_1 = arith.constant 0 : i32
    return %arg0, %c0_i32, %c0_i32_0 : i32, i32, i32
  }
  func.func @transform_3(%arg0: i32, %arg1: i32) -> (i32, i32, i32) {
    %c0_i32 = arith.constant 0 : i32
    %c0_i32_0 = arith.constant 0 : i32
    return %arg0, %arg1, %c0_i32 : i32, i32, i32
  }
}

</mosaic_0001>

<llo_original>
// kernel: tpu_custom_call.1
$region0: #{tpu_custom_call.1}
  #allocation0 [shape = 'u32[]', space=smem, size = 0x4, offset = 0x4, fixed_abs, tag = 'smem constant byte address 0x4 - core index']
  #allocation1 [shape = 'u32[72,128]{1,0:T(1,128)}', space=vmem, size = 0x9000, scoped, tag = 'internal scratch']
  %s0 = inlined_call_operand.hbm [shape: bf16[3,16,16], index: 0, kind: input, shape index: {}]
  %s1 = inlined_call_operand.hbm [shape: bf16[3,16,128], index: 1, kind: input, shape index: {}]
  %s2 = inlined_call_operand.hbm [shape: f32[3,1,128], index: 2, kind: input, shape index: {}]
  %s3 = inlined_call_operand.hbm [shape: f32[3,16,128], index: 3, kind: output, shape index: {}]
  %s4 = sld [smem:[#allocation0]]
  $region57: #{tpu_custom_call.1} parent=0
    _
  %s6 = ssub.s32 1, %s4
  %s7 = scalar_select 0, %s6, %s4
  $region1: #{tpu_custom_call.1} parent=0
    #allocation2 [shape = 'u8[8192]{0}', space=vmem, size = 0x2000, scoped, tag = 'input window, operand 0']
    #allocation3 [shape = 's32[2]{0}', space=sflag, size = 0x8, scoped, tag = 'scoped memory for tpu_custom_call.1']
    #allocation4 [shape = 's32[2]{0}', space=sflag, size = 0x8, scoped, tag = 'scoped memory for tpu_custom_call.1']
    #allocation5 [shape = 'u8[8192]{0}', space=vmem, size = 0x2000, scoped, tag = 'input window, operand 1']
    #allocation6 [shape = 's32[2]{0}', space=sflag, size = 0x8, scoped, tag = 'scoped memory for tpu_custom_call.1']
    #allocation7 [shape = 'u8[1024]{0}', space=vmem, size = 0x400, scoped, tag = 'input window, operand 2']
    #allocation8 [shape = 'u8[16384]{0}', space=vmem, size = 0x4000, scoped, tag = 'output window, operand 0']
    %8 = vsyncpa [#allocation3], 0
    %s9 = scalar_lea.sflag [#allocation3], 1
    %10 = vsyncpa %s9, 0
    %11 = vsyncpa [#allocation6], 0
    %s12 = scalar_lea.sflag [#allocation6], 1
    %13 = vsyncpa %s12, 0
    %14 = vsyncpa [#allocation4], 0
    %s15 = scalar_lea.sflag [#allocation4], 1
    %16 = vsyncpa %s15, 0
    loop: start=0, step=1, limit=5
    $region2: #{tpu_custom_call.1} parent=1 // loop_pre_header
      _
    $region3: #{tpu_custom_call.1} parent=1 // loop_header
      %s18 = sphi 0, %s22
      %p19 = scmp.ge.s32.totalorder %s18, 5
      %s25 = sphi 0, %s37
      %s26 = sphi 0, %s33
      %s27 = sphi 0, %s25
      %s28 = sphi 0, %s26
      %s29 = sphi 0, %s27
      %s30 = sphi 0, %s28
      %s42 = sphi 0, %s44
      %s45 = sphi 0, %s42
      %s46 = sphi 0, %s45
      %s62 = sphi 0, %s46
      %s68 = sphi 0, %s70
      %s71 = sphi 0, %s68
      %s72 = sphi 0, %s71
      %s88 = sphi 0, %s72
      %s94 = sphi 0, %s96
      %s97 = sphi 0, %s94
      %s98 = sphi 0, %s97
      %s114 = sphi 0, %s98
      %s122 = sphi 0, %s124
      %s125 = sphi 0, %s122
      %s126 = sphi 0, %s125
      %s142 = sphi 0, %s126
    $region4: #{tpu_custom_call.1} parent=1 // loop_header_branch
      %21 = sbr.rel (%p19) target = $region8
    $region5: #{tpu_custom_call.1} parent=1 // loop_body
      %s23 = ssub.s32 %s18, 1
      %s24 = ssub.s32 %s18, 2
      %s31 = sadd.s32 1, %s26
      %p32 = scmp.ge.s32.totalorder %s31, 1
      %s33 = scalar_select %p32, 0, %s31
      %s34 = sadd.s32 1, %s25
      %s35 = scalar_select %p32, %s34, %s25
      %p36 = scmp.ge.s32.totalorder %s35, 3
      %s37 = scalar_select %p36, 0, %s35
      %s38 = ssub.s32 %s25, %s37
      %s39 = ssub.s32 %s26, %s33
      %s40 = sor.u32 %s38, %s39
      %p41 = scmp.eq.s32.totalorder %s40, 0
      %s43 = sadd.s32 %s42, 1
      %s44 = scalar_select %p41, %s42, %s43
      %p47 = pneg %p41
      %p48 = scmp.eq.s32.totalorder %s18, 2
      %p49 = por %p47, %p48
      %p50 = scmp.ne.s32.totalorder %s42, %s45
      %p51 = scmp.eq.s32.totalorder %s18, 0
      %p52 = por %p50, %p51
      %p53 = scmp.ne.s32.totalorder %s42, %s45
      %p54 = scmp.eq.s32.totalorder %s23, 2
      %p55 = por %p53, %p54
      %p56 = scmp.ne.s32.totalorder %s45, %s46
      %p57 = scmp.eq.s32.totalorder %s23, 0
      %p58 = por %p56, %p57
      %p59 = scmp.ne.s32.totalorder %s45, %s46
      %p60 = scmp.eq.s32.totalorder %s24, 2
      %p61 = por %p59, %p60
      %p63 = scmp.ne.s32.totalorder %s46, %s62
      %p64 = scmp.eq.s32.totalorder %s24, 0
      %p65 = por %p63, %p64
      %s66 = ssub.s32 %s25, %s37
      %p67 = scmp.eq.s32.totalorder %s66, 0
      %s69 = sadd.s32 %s68, 1
      %s70 = scalar_select %p67, %s68, %s69
      %p73 = pneg %p67
      %p74 = scmp.eq.s32.totalorder %s18, 2
      %p75 = por %p73, %p74
      %p76 = scmp.ne.s32.totalorder %s68, %s71
      %p77 = scmp.eq.s32.totalorder %s18, 0
      %p78 = por %p76, %p77
      %p79 = scmp.ne.s32.totalorder %s68, %s71
      %p80 = scmp.eq.s32.totalorder %s23, 2
      %p81 = por %p79, %p80
      %p82 = scmp.ne.s32.totalorder %s71, %s72
      %p83 = scmp.eq.s32.totalorder %s23, 0
      %p84 = por %p82, %p83
      %p85 = scmp.ne.s32.totalorder %s71, %s72
      %p86 = scmp.eq.s32.totalorder %s24, 2
      %p87 = por %p85, %p86
      %p89 = scmp.ne.s32.totalorder %s72, %s88
      %p90 = scmp.eq.s32.totalorder %s24, 0
      %p91 = por %p89, %p90
      %s92 = ssub.s32 %s25, %s37
      %p93 = scmp.eq.s32.totalorder %s92, 0
      %s95 = sadd.s32 %s94, 1
      %s96 = scalar_select %p93, %s94, %s95
      %p99 = pneg %p93
      %p100 = scmp.eq.s32.totalorder %s18, 2
      %p101 = por %p99, %p100
      %p102 = scmp.ne.s32.totalorder %s94, %s97
      %p103 = scmp.eq.s32.totalorder %s18, 0
      %p104 = por %p102, %p103
      %p105 = scmp.ne.s32.totalorder %s94, %s97
      %p106 = scmp.eq.s32.totalorder %s23, 2
      %p107 = por %p105, %p106
      %p108 = scmp.ne.s32.totalorder %s97, %s98
      %p109 = scmp.eq.s32.totalorder %s23, 0
      %p110 = por %p108, %p109
      %p111 = scmp.ne.s32.totalorder %s97, %s98
      %p112 = scmp.eq.s32.totalorder %s24, 2
      %p113 = por %p111, %p112
      %p115 = scmp.ne.s32.totalorder %s98, %s114
      %p116 = scmp.eq.s32.totalorder %s24, 0
      %p117 = por %p115, %p116
      %s118 = ssub.s32 %s25, %s37
      %s119 = ssub.s32 %s26, %s33
      %s120 = sor.u32 %s118, %s119
      %p121 = scmp.eq.s32.totalorder %s120, 0
      %s123 = sadd.s32 %s122, 1
      %s124 = scalar_select %p121, %s122, %s123
      %p127 = pneg %p121
      %p128 = scmp.eq.s32.totalorder %s18, 2
      %p129 = por %p127, %p128
      %p130 = scmp.ne.s32.totalorder %s122, %s125
      %p131 = scmp.eq.s32.totalorder %s18, 0
      %p132 = por %p130, %p131
      %p133 = scmp.ne.s32.totalorder %s122, %s125
      %p134 = scmp.eq.s32.totalorder %s23, 2
      %p135 = por %p133, %p134
      %p136 = scmp.ne.s32.totalorder %s125, %s126
      %p137 = scmp.eq.s32.totalorder %s23, 0
      %p138 = por %p136, %p137
      %p139 = scmp.ne.s32.totalorder %s125, %s126
      %p140 = scmp.eq.s32.totalorder %s24, 2
      %p141 = por %p139, %p140
      %p143 = scmp.ne.s32.totalorder %s126, %s142
      %p144 = scmp.eq.s32.totalorder %s24, 0
      %p145 = por %p143, %p144
      %p146 = scmp.le.s32.totalorder 1, %s18
      %p147 = scmp.lt.s32.totalorder %s18, 4
      %p148 = pnand %p146, %p147
      %p149 = pneg %p148
      // Predicated region
      $region9: #{tpu_custom_call.1} parent=5 // pred_check
        _
      $region10: #{tpu_custom_call.1} parent=5 // pred_check_branch
        %151 = sbr.rel (%p148) target = $region12
      $region11: #{tpu_custom_call.1} parent=5 // pred_region
        %s152 = ssub.s32 %s18, 1
      $region12: #{tpu_custom_call.1} parent=5 // pred_fallthru
        _
      %p153 = scmp.lt.s32.totalorder %s18, 3
      // Predicated region
      $region13: #{tpu_custom_call.1} parent=5 // pred_check
        %p154 = pneg %p153
      $region14: #{tpu_custom_call.1} parent=5 // pred_check_branch
        %156 = sbr.rel (%p154) target = $region16
      $region15: #{tpu_custom_call.1} parent=5 // pred_region
        // Predicated region
        $region17: #{tpu_custom_call.1} parent=15 // pred_check
          %p157 = pneg %p52
        $region18: #{tpu_custom_call.1} parent=15 // pred_check_branch
          %159 = sbr.rel (%p157) target = $region20
        $region19: #{tpu_custom_call.1} parent=15 // pred_region
          %s160 = sand.u32 %s42, 1
          %s161 = scalar_lea.sflag [#allocation3], %s160
          %s162 = sand.u32 %s42, 1
          %s163 = smul.addr %s162, 8
          %s164 = scalar_lea.vmem [#allocation2], %s163
          %s165 = smul.u32 2, %s26
          %167 = vsyncadd %s161, 0
          %s168 = smul.addr %s25, 2
          %s169 = sadd.s32 %s165, %s168
          %s170 = smul.addr %s169, 4
          %s171 = scalar_lea.hbm %s0, %s170
          %s172 = sshll.u32 %s171, 4
          %s173 = int_to_ptr.hbm [resolvable:$true] %s172
          %s174 = sshll.u32 %s164, 4
          %s175 = int_to_ptr.vmem [resolvable:$true] %s174
          %180 = dma.hbm_to_vmem [thread:$0]  %s173, 128, %s175, %s161, 64, 64, 4
        $region20: #{tpu_custom_call.1} parent=15 // pred_fallthru
          _
        // Predicated region
        $region21: #{tpu_custom_call.1} parent=15 // pred_check
          %p181 = pneg %p78
        $region22: #{tpu_custom_call.1} parent=15 // pred_check_branch
          %183 = sbr.rel (%p181) target = $region24
        $region23: #{tpu_custom_call.1} parent=15 // pred_region
          %s184 = sand.u32 %s18, 1
          %s185 = scalar_lea.sflag [#allocation6], %s184
          %s186 = sand.u32 %s68, 1
          %s187 = smul.addr %s186, 8
          %s188 = scalar_lea.vmem [#allocation5], %s187
          %190 = vsyncadd %s185, 0
          %s191 = smul.addr %s25, 2
          %s192 = smul.addr %s191, 4
          %s193 = scalar_lea.hbm %s1, %s192
          %s194 = sshll.u32 %s193, 4
          %s195 = int_to_ptr.hbm [resolvable:$true] %s194
          %s196 = sshll.u32 %s188, 4
          %s197 = int_to_ptr.vmem [resolvable:$true] %s196
          %202 = dma.hbm_to_vmem [thread:$0]  %s195, 128, %s197, %s185, 64, 64, 4
        $region24: #{tpu_custom_call.1} parent=15 // pred_fallthru
          _
        // Predicated region
        $region25: #{tpu_custom_call.1} parent=15 // pred_check
          %p203 = pneg %p104
        $region26: #{tpu_custom_call.1} parent=15 // pred_check_branch
          %205 = sbr.rel (%p203) target = $region28
        $region27: #{tpu_custom_call.1} parent=15 // pred_region
          %s206 = sand.u32 %s18, 1
          %s207 = scalar_lea.sflag [#allocation6], %s206
          %s208 = sand.u32 %s94, 1
          %s209 = scalar_lea.vmem [#allocation7], %s208
          %211 = vsyncadd %s207, 0
          %s212 = scalar_lea.hbm %s2, %s25
          %s214 = sshll.u32 %s212, 4
          %s215 = int_to_ptr.hbm [resolvable:$true] %s214
          %s216 = sshll.u32 %s209, 4
          %s217 = int_to_ptr.vmem [resolvable:$true] %s216
          %219 = dma.hbm_to_vmem [thread:$0]  %s215, 16, %s217, %s207
        $region28: #{tpu_custom_call.1} parent=15 // pred_fallthru
          _
      $region16: #{tpu_custom_call.1} parent=5 // pred_fallthru
        _
      %p220 = scmp.le.s32.totalorder 1, %s18
      %p221 = scmp.lt.s32.totalorder %s18, 4
      %p222 = pnand %p220, %p221
      %p223 = pneg %p222
      // Predicated region
      $region29: #{tpu_custom_call.1} parent=5 // pred_check
        _
      $region30: #{tpu_custom_call.1} parent=5 // pred_check_branch
        %225 = sbr.rel (%p222) target = $region32
      $region31: #{tpu_custom_call.1} parent=5 // pred_region
        %s226 = ssub.s32 %s18, 1
        %s227 = sand.u32 %s45, 1
        %s228 = scalar_lea.sflag [#allocation3], %s227
        %s229 = sand.u32 %s45, 1
        %s230 = smul.addr %s229, 8
        %s231 = scalar_lea.vmem [#allocation2], %s230
        // Predicated region
        $region33: #{tpu_custom_call.1} parent=31 // pred_check
          %p232 = pneg %p58
        $region34: #{tpu_custom_call.1} parent=31 // pred_check_branch
          %234 = sbr.rel (%p232) target = $region36
        $region35: #{tpu_custom_call.1} parent=31 // pred_region
          %236 = dma.done %s228, 128
        $region36: #{tpu_custom_call.1} parent=31 // pred_fallthru
          _
        %s237 = sand.u32 %s23, 1
        %s238 = scalar_lea.sflag [#allocation6], %s237
        %s239 = sand.u32 %s71, 1
        %s240 = smul.addr %s239, 8
        %s241 = scalar_lea.vmem [#allocation5], %s240
        // Predicated region
        $region37: #{tpu_custom_call.1} parent=31 // pred_check
          %p242 = pneg %p84
        $region38: #{tpu_custom_call.1} parent=31 // pred_check_branch
          %244 = sbr.rel (%p242) target = $region40
        $region39: #{tpu_custom_call.1} parent=31 // pred_region
          %246 = dma.done %s238, 128
        $region40: #{tpu_custom_call.1} parent=31 // pred_fallthru
          _
        %s247 = sand.u32 %s23, 1
        %s248 = scalar_lea.sflag [#allocation6], %s247
        %s249 = sand.u32 %s97, 1
        %s250 = scalar_lea.vmem [#allocation7], %s249
        // Predicated region
        $region41: #{tpu_custom_call.1} parent=31 // pred_check
          %p251 = pneg %p110
        $region42: #{tpu_custom_call.1} parent=31 // pred_check_branch
          %253 = sbr.rel (%p251) target = $region44
        $region43: #{tpu_custom_call.1} parent=31 // pred_region
          %255 = dma.done %s248, 16
        $region44: #{tpu_custom_call.1} parent=31 // pred_fallthru
          _
        %s256 = sand.u32 %s45, 1
        %s257 = scalar_lea.sflag [#allocation3], %s256
        %s258 = sand.u32 %s45, 1
        %s259 = smul.addr %s258, 8
        %s260 = scalar_lea.vmem [#allocation2], %s259
        %p261 = pneg %p58
        %p262 = pneg %p55
        %s263 = sand.u32 %s23, 1
        %s264 = scalar_lea.sflag [#allocation6], %s263
        %s265 = sand.u32 %s71, 1
        %s266 = smul.addr %s265, 8
        %s267 = scalar_lea.vmem [#allocation5], %s266
        %p268 = pneg %p84
        %p269 = pneg %p81
        %s270 = sand.u32 %s23, 1
        %s271 = scalar_lea.sflag [#allocation6], %s270
        %s272 = sand.u32 %s97, 1
        %s273 = scalar_lea.vmem [#allocation7], %s272
        %p274 = pneg %p110
        %p275 = pneg %p107
        %p276 = pneg %p138
        %p277 = pneg %p135
        %s278 = sand.u32 %s125, 1
        %s279 = scalar_lea.sflag [#allocation4], %s278
        %s280 = sand.u32 %s125, 1
        %s281 = smul.addr %s280, 16
        %s282 = scalar_lea.vmem [#allocation8], %s281
        %s283 = smul.u32 2, %s28
        %s284 = smul.u32 2, %s28
        %v286 = vld [vmem:[%s231] sm:$0xf]
        %v287 = vld [vmem:[%s231 + $0x4] sm:$0xf]
        %v288 = vld [vmem:[%s241] sm:$0xf]
        %v289 = vld [vmem:[%s241 + $0x4] sm:$0xf]
        %v290 = vld [vmem:[%s250] sm:$0x1]
        %v292 = vperm.slane %v290, 0
        %v296 = vunpack.c.l.b16 %v286
        %v297 = vunpack.c.l.b16 %v287
        %v298 = vpack.c.b16 %v297, %v296
        %v301 = vunpack.c.l.b16 %v288
        %v302 = vunpack.c.l.b16 %v289
        %v303 = vpack.c.b16 %v302, %v301
        %vm305 = vcmask 130048
        %v307 = vsel %vm305, %v298, 0
        %309 = vmatpush.bf16.msra.mxu0 0
        %310 = vmatpush.bf16.msra.mxu0 0
        %311 = vmatpush.bf16.msra.mxu0 0
        %312 = vmatpush.bf16.msra.mxu0 0
        %313 = vmatpush.bf16.msra.mxu0 0
        %314 = vmatpush.bf16.msra.mxu0 0
        %315 = vmatpush.bf16.msra.mxu0 0
        %316 = vmatpush.bf16.msra.mxu0 %v303
        %317 = vmatmul.bf16.gmra.mxu0 %v307
        %v318 = vpop.f32.mrf.mxu0
        %v319 = vadd.f32 %v292, %v318
        %v320 = vpop.f32.mrf.mxu0
        %v321 = vadd.f32 %v292, %v320
        %322 = vdwg.mxu0
        %323 = vst [vmem:[%s282] sm:$0xff] %v319
        %324 = vst [vmem:[%s282 + $0x8] sm:$0xff] %v321
        %s325 = sand.u32 %s125, 1
        %s326 = scalar_lea.sflag [#allocation4], %s325
        %s327 = sand.u32 %s125, 1
        %s328 = smul.addr %s327, 16
        %s329 = scalar_lea.vmem [#allocation8], %s328
        // Predicated region
        $region45: #{tpu_custom_call.1} parent=31 // pred_check
          %p330 = pneg %p135
        $region46: #{tpu_custom_call.1} parent=31 // pred_check_branch
          %332 = sbr.rel (%p330) target = $region48
        $region47: #{tpu_custom_call.1} parent=31 // pred_region
          %s333 = smul.u32 2, %s28
          %335 = vsyncadd %s326, 0
          %s336 = smul.addr %s27, 2
          %s337 = sadd.s32 %s333, %s336
          %s338 = smul.addr %s337, 8
          %s339 = scalar_lea.hbm %s3, %s338
          %s340 = sshll.u32 %s329, 4
          %s341 = int_to_ptr.vmem [resolvable:$true] %s340
          %s342 = sshll.u32 %s339, 4
          %s343 = int_to_ptr.hbm [resolvable:$true] %s342
          %348 = dma.vmem_to_hbm [thread:$0]  %s341, 256, %s343, %s326, 128, 128, 8
        $region48: #{tpu_custom_call.1} parent=31 // pred_fallthru
          _
      $region32: #{tpu_custom_call.1} parent=5 // pred_fallthru
        _
      %p349 = scmp.le.s32.totalorder 2, %s18
      // Predicated region
      $region49: #{tpu_custom_call.1} parent=5 // pred_check
        %p350 = pneg %p349
      $region50: #{tpu_custom_call.1} parent=5 // pred_check_branch
        %352 = sbr.rel (%p350) target = $region52
      $region51: #{tpu_custom_call.1} parent=5 // pred_region
        %s353 = ssub.s32 %s18, 2
        // Predicated region
        $region53: #{tpu_custom_call.1} parent=51 // pred_check
          %p354 = pneg %p141
        $region54: #{tpu_custom_call.1} parent=51 // pred_check_branch
          %356 = sbr.rel (%p354) target = $region56
        $region55: #{tpu_custom_call.1} parent=51 // pred_region
          %s357 = sand.u32 %s126, 1
          %s358 = scalar_lea.sflag [#allocation4], %s357
          %s359 = sand.u32 %s126, 1
          %s360 = smul.addr %s359, 16
          %s361 = scalar_lea.vmem [#allocation8], %s360
          %363 = dma.done %s358, 256
        $region56: #{tpu_custom_call.1} parent=51 // pred_fallthru
          _
      $region52: #{tpu_custom_call.1} parent=5 // pred_fallthru
        _
    $region6: #{tpu_custom_call.1} parent=1 // loop_footer
      %s22 = sadd.s32 1, %s18
    $region7: #{tpu_custom_call.1} parent=1 // loop_footer_branch
      %17 = sbr.rel target = $region3
    $region8: #{tpu_custom_call.1} parent=1 // loop_exit
      _
    %364 = vsyncpa [#allocation3], 1
    %s365 = scalar_lea.sflag [#allocation3], 1
    %366 = vsyncpa %s365, 1
    %367 = vsyncpa [#allocation6], 1
    %s368 = scalar_lea.sflag [#allocation6], 1
    %369 = vsyncpa %s368, 1
    %370 = vsyncpa [#allocation4], 1
    %s371 = scalar_lea.sflag [#allocation4], 1
    %372 = vsyncpa %s371, 1

</llo_original>
